<compile_context>
chip_gen: v7x
topology: tpu7x:2x2x1
jax: 0.10.0
libtpu: 0.0.40
codegen_flags: <defaults>
</compile_context>

<pallas_src>
import functools

import numpy as np
import jax
import jax.numpy as jnp
from jax.experimental import pallas as pl
from jax.experimental.pallas import tpu as pltpu


@functools.lru_cache(maxsize=None)
def _vmem_limit():
    """96 MiB on v5e/v6e (128 MiB physical VMEM), 48 MiB otherwise (v7x: 64 MiB)."""
    try:
        kind = jax.devices()[0].device_kind.lower()
    except Exception:
        kind = ""
    if ("v5" in kind) or ("v6" in kind):
        return 96 * 1024 * 1024
    return 48 * 1024 * 1024


def _largest_tile(n, target, align):
    """Largest divisor of n that is <= target and a multiple of align; n if small."""
    if n <= target:
        return n
    t = (target // align) * align
    while t >= align:
        if n % t == 0:
            return t
        t -= align
    return n


# ----------------------------------------------------------------------------
# Pallas kernels
# ----------------------------------------------------------------------------
def _conv_kernel(z_ref, w_ref, m_ref, b_ref, o_ref, acc_ref, *,
                 shifts, chunk, lv, wp, out_padded):
    """3x3 conv (pad=1) + bias + ReLU over a flat padded slab.

    Canonical slab layout (rows): [1 zero row | (H+2)*(W+2) padded image | 7 zero rows].
    z_ref : (Lp+8, Cin) fp32 (or (Lv, 9*Cin) for the tap-folded first layer)
    w_ref : (ntaps, K, tco) bf16 tap-major weights
    m_ref : (chunk, 1) fp32 column-validity mask (0 at x >= W)
    b_ref : (1, tco) fp32
    o_ref : plain (Lv, tco) fp32, or the next layer's padded slab (Lp+8, tco).

    For flat output index m = y*(W+2)+x, tap (dy,dx) reads the contiguous flat
    index m + 1 + dy*(W+2) + dx, so every tap is a static shifted slice of the
    resident slab feeding an MXU matmul-accumulate into acc_ref.
    """
    bias = b_ref[...]
    mask = m_ref[...]
    if out_padded:
        tco = o_ref.shape[1]
        # halo rows of the next layer's padded input (word-aligned even offsets)
        o_ref[pl.ds(0, wp + 2), :] = jnp.zeros((wp + 2, tco), o_ref.dtype)
        o_ref[pl.ds(lv + wp + 2, wp + 6), :] = jnp.zeros((wp + 6, tco), o_ref.dtype)
        out_off = wp + 2
    else:
        out_off = 0

    for m0 in range(0, lv, chunk):
        acc_ref[...] = jnp.dot(
            z_ref[pl.ds(m0 + shifts[0], chunk), :].astype(jnp.bfloat16),
            w_ref[0], preferred_element_type=jnp.float32)
        for t in range(1, len(shifts)):
            acc_ref[...] += jnp.dot(
                z_ref[pl.ds(m0 + shifts[t], chunk), :].astype(jnp.bfloat16),
                w_ref[t], preferred_element_type=jnp.float32)
        val = jnp.maximum(acc_ref[...] + bias, 0.0) * mask
        o_ref[pl.ds(m0 + out_off, chunk), :] = val.astype(o_ref.dtype)


def _fc_kernel(x_ref, w_ref, b_ref, o_ref, acc_ref, *, relu):
    """Dense layer, grid = (Nout//tn, K//tk); K (reduction) is innermost."""
    k = pl.program_id(1)

    @pl.when(k == 0)
    def _init():
        acc_ref[...] = jnp.zeros_like(acc_ref)

    acc_ref[...] += jnp.dot(x_ref[...], w_ref[...],
                            preferred_element_type=jnp.float32)

    @pl.when(k == pl.num_programs(1) - 1)
    def _finalize():
        r = acc_ref[...] + b_ref[...]
        if relu:
            r = jnp.maximum(r, 0.0)
        o_ref[...] = r


# ----------------------------------------------------------------------------
# Layer wrappers
# ----------------------------------------------------------------------------
def conv3x3_relu(x, w, b, *, hw=None, in_padded=False, out_padded=False,
                 fold_taps=False):
    """3x3/pad=1 conv + bias + ReLU.

    x : NHWC fp32 (in_padded=False) or a padded flat slab (N, (H+2)*(W+2)+8, Cin)
        produced by a previous conv3x3_relu(..., out_padded=True) call
        (in_padded=True; hw=(H, W) required).
    w : (3, 3, Cin, Cout) (any float dtype, used as bf16), b: (Cout,) fp32.
    Returns NHWC fp32 (out_padded=False) or the next conv's padded flat slab.
    """
    Cin, Cout = w.shape[2], w.shape[3]
    if in_padded:
        assert hw is not None
        H, W = hw
        N = x.shape[0]
        zp = x
    else:
        N, H, W, _ = x.shape
    Wp = W + 2
    Lp = (H + 2) * Wp
    Lv = H * Wp

    if not in_padded:
        zp = jnp.pad(x.astype(jnp.float32),
                     ((0, 0), (1, 1), (1, 1), (0, 0))).reshape(N, Lp, Cin)
        zp = jnp.pad(zp, ((0, 0), (1, 7), (0, 0)))        # canonical slab layout

    shifts = tuple(1 + dy * Wp + dx for dy in range(3) for dx in range(3))
    wk = w.reshape(9, Cin, Cout).astype(jnp.bfloat16)
    if fold_taps:
        # partial im2col: fold the 9 taps into K = 9*Cin (first layer, Cin=3)
        zp = jnp.concatenate([zp[:, s:s + Lv, :] for s in shifts], axis=-1)
        wk = wk.reshape(1, 9 * Cin, Cout)
        shifts = (0,)
    rows_in = zp.shape[1]
    cin_eff = zp.shape[2]
    ntaps = len(shifts)

    tco = min(Cout, 256)                        # split Cout for the 512-ch layers
    # output chunk = k rows of the image, so the column mask is chunk-invariant
    k = 1
    for d in range(min(H, max(1, 2048 // Wp)), 0, -1):
        if H % d == 0:
            k = d
            break
    chunk = k * Wp
    mask = jnp.tile((jnp.arange(Wp) < W).astype(jnp.float32), k).reshape(chunk, 1)

    rows_out = Lp + 8 if out_padded else Lv

    kernel = functools.partial(_conv_kernel, shifts=shifts, chunk=chunk,
                               lv=Lv, wp=Wp, out_padded=out_padded)
    out = pl.pallas_call(
        kernel,
        out_shape=jax.ShapeDtypeStruct((N, rows_out, Cout), jnp.float32),
        grid_spec=pltpu.PrefetchScalarGridSpec(
            num_scalar_prefetch=0,
            grid=(Cout // tco, N),              # n innermost: weight tile fetched
            in_specs=[                          # once per Cout tile
                pl.BlockSpec((None, rows_in, cin_eff), lambda c, n: (n, 0, 0)),
                pl.BlockSpec((ntaps, cin_eff, tco), lambda c, n: (0, 0, c)),
                pl.BlockSpec((chunk, 1), lambda c, n: (0, 0)),
                pl.BlockSpec((1, tco), lambda c, n: (0, c)),
            ],
            out_specs=pl.BlockSpec((None, rows_out, tco), lambda c, n: (n, 0, c)),
            scratch_shapes=[pltpu.VMEM((chunk, tco), jnp.float32)],
        ),
        compiler_params=pltpu.CompilerParams(
            dimension_semantics=("parallel", "parallel"),
            vmem_limit_bytes=_vmem_limit(),
        ),
    )(zp, wk, mask, b.reshape(1, Cout).astype(jnp.float32))

    if out_padded:
        return out                              # ready-to-consume next-layer slab
    # plain layout: drop the 2 garbage (zeroed) columns per row
    return out.reshape(N, H, Wp, Cout)[:, :, :W, :]


def linear(x, w, b, *, relu):
    """x: (M,K) f32, w: (K,Nout) bf16, b: (Nout,) f32 -> (M,Nout) f32."""
    M, K = x.shape
    Nout = w.shape[1]
    Np = ((Nout + 127) // 128) * 128            # lane-dense output (1000 -> 1024)
    if Np != Nout:
        w = jnp.pad(w, ((0, 0), (0, Np - Nout)))
        b = jnp.pad(b, ((0, Np - Nout),))

    tk = _largest_tile(K, 3584, 128)            # big K tiles: fewer weight DMAs
    tn = _largest_tile(Np, min(2048, max(128, Np // 2)), 128)  # >=2 Nout tiles

    x = x.astype(jnp.bfloat16)
    w = w.astype(jnp.bfloat16)
    kernel = functools.partial(_fc_kernel, relu=relu)
    out = pl.pallas_call(
        kernel,
        out_shape=jax.ShapeDtypeStruct((M, Np), jnp.float32),
        grid_spec=pltpu.PrefetchScalarGridSpec(
            num_scalar_prefetch=0,
            grid=(Np // tn, K // tk),
            in_specs=[
                pl.BlockSpec((M, tk), lambda j, k: (0, k)),
                pl.BlockSpec((tk, tn), lambda j, k: (k, j)),
                pl.BlockSpec((1, tn), lambda j, k: (0, j)),
            ],
            out_specs=pl.BlockSpec((M, tn), lambda j, k: (0, j)),
            scratch_shapes=[pltpu.VMEM((M, tn), jnp.float32)],
        ),
        compiler_params=pltpu.CompilerParams(
            dimension_semantics=("parallel", "arbitrary"),
            vmem_limit_bytes=_vmem_limit(),
        ),
    )(x, w, b.reshape(1, Np).astype(jnp.float32))
    return out[:, :Nout] if Np != Nout else out


def maxpool2x2(x):
    N, H, W, C = x.shape
    return jnp.max(x.reshape(N, H // 2, 2, W // 2, 2, C), axis=(2, 4))


def adaptive_avg_pool_7(x):
    """PyTorch AdaptiveAvgPool2d((7,7)) semantics, NHWC layout."""
    N, H, W, C = x.shape
    rows = []
    for i in range(7):
        h0 = (i * H) // 7
        h1 = -((-(i + 1) * H) // 7)
        cols = []
        for j in range(7):
            w0 = (j * W) // 7
            w1 = -((-(j + 1) * W) // 7)
            cols.append(jnp.mean(x[:, h0:h1, w0:w1, :], axis=(1, 2)))
        rows.append(jnp.stack(cols, axis=1))
    return jnp.stack(rows, axis=1)


# ----------------------------------------------------------------------------
# VGG16 forward
# ----------------------------------------------------------------------------
def vgg16_forward(x_nchw, params):
    x = jnp.transpose(x_nchw, (0, 2, 3, 1)).astype(jnp.float32)  # NCHW -> NHWC

    convs = params["convs"]
    ci = 0
    H, W = x.shape[1], x.shape[2]
    # features_0: conv blocks (pool after the first four blocks only)
    for n_convs, do_pool in ((2, True), (2, True), (3, True), (3, True), (3, False)):
        for li in range(n_convs):
            w, b = convs[ci]
            ci += 1
            first = li == 0
            last = li == n_convs - 1
            x = conv3x3_relu(
                x, w, b, hw=(H, W),
                in_padded=not first,             # chained padded slab from prev conv
                out_padded=not last,             # emit next conv's padded slab
                fold_taps=first and w.shape[2] == 3)
        if do_pool:
            x = maxpool2x2(x)
            H //= 2
            W //= 2
    last_conv = x                      # output of features_0 (last conv + ReLU)

    x = maxpool2x2(x)                  # features_1 (final MaxPool2d)
    x = adaptive_avg_pool_7(x)         # avgpool -> (N, 7, 7, 512)

    # flatten exactly like torch.flatten on NCHW: (C, H, W) ordering
    flat = jnp.transpose(x, (0, 3, 1, 2)).reshape(x.shape[0], -1)

    (w1, b1), (w2, b2), (w3, b3) = params["fc"]
    h = linear(flat, w1, b1, relu=True)                # classifier[0:3] (Dropout = id)
    penultimate = linear(h, w2, b2, relu=True)         # classifier[3:6] (Dropout = id)
    last_fc = linear(penultimate, w3, b3, relu=False)  # classifier_1: Linear(4096,1000)
    return last_conv, penultimate, last_fc


# ----------------------------------------------------------------------------
# Deterministic parameter init (He-normal; checkpoint loading not reproduced).
# Conv and FC weights are stored in bfloat16 (bf16 MXU / weight streaming),
# biases in fp32; accumulation is always fp32.
# ----------------------------------------------------------------------------
def init_params(keys):
    conv_cfg = [(3, 64), (64, 64),
                (64, 128), (128, 128),
                (128, 256), (256, 256), (256, 256),
                (256, 512), (512, 512), (512, 512),
                (512, 512), (512, 512), (512, 512)]
    convs = []
    for i, (cin, cout) in enumerate(conv_cfg):
        std = (2.0 / (9 * cin)) ** 0.5
        w = (std * jax.random.normal(keys[i], (3, 3, cin, cout), jnp.float32)
             ).astype(jnp.bfloat16)
        b = jnp.zeros((cout,), jnp.float32)
        convs.append((w, b))

    fc_cfg = [(512 * 7 * 7, 4096), (4096, 4096), (4096, 1000)]
    fcs = []
    for j, (fin, fout) in enumerate(fc_cfg):
        std = (2.0 / fin) ** 0.5
        w = (std * jax.random.normal(keys[13 + j], (fin, fout), jnp.float32)
             ).astype(jnp.bfloat16)
        b = jnp.zeros((fout,), jnp.float32)
        fcs.append((w, b))
    return {"convs": convs, "fc": fcs}


if __name__ == "__main__":
    keys = jax.random.split(jax.random.PRNGKey(0), 21)
    # Small input consistent with the module: batch=2, 3 channels, 64x64 (NCHW).
    x = jax.random.normal(keys[0], (2, 3, 64, 64), jnp.float32)
    params = init_params(keys[1:17])

    # Tolerant spot-check of the conv kernels (fold + padded chaining + 9-tap
    # path) against the XLA reference conv; generous tolerance for bf16 drift.
    cx = jax.random.normal(keys[17], (2, 16, 16, 3), jnp.float32)
    cw1 = 0.2 * jax.random.normal(keys[18], (3, 3, 3, 32), jnp.float32)
    cb1 = 0.05 * jax.random.normal(keys[19], (32,), jnp.float32)
    cw2 = 0.1 * jax.random.normal(keys[20], (3, 3, 32, 64), jnp.float32)
    cb2 = jnp.zeros((64,), jnp.float32)

    mid = conv3x3_relu(cx, cw1, cb1, out_padded=True, fold_taps=True)
    got = conv3x3_relu(mid, cw2, cb2, hw=(16, 16), in_padded=True, out_padded=False)

    def _ref_conv(z, w, b):
        y = jax.lax.conv_general_dilated(
            z, w, (1, 1), "SAME", dimension_numbers=("NHWC", "HWIO", "NHWC"))
        return jnp.maximum(y + b, 0.0)

    want = _ref_conv(_ref_conv(cx, cw1, cb1), cw2, cb2)
    assert np.allclose(np.asarray(got), np.asarray(want), rtol=5e-2, atol=5e-2), \
        "conv kernel mismatch vs XLA reference"

    fwd = jax.jit(vgg16_forward)
    last_conv, penultimate, last_fc = fwd(x, params)
    jax.block_until_ready((last_conv, penultimate, last_fc))

    # Match the PyTorch return: element [0] as numpy, conv map in (C, H, W).
    lc0 = np.transpose(np.asarray(last_conv[0]), (2, 0, 1))   # (512, 4, 4)
    p0 = np.asarray(penultimate[0])                           # (4096,)
    lf0 = np.asarray(last_fc[0])                              # (1000,)

    assert lc0.shape == (512, 4, 4)
    assert p0.shape == (4096,)
    assert lf0.shape == (1000,)
    assert np.isfinite(lc0).all() and np.isfinite(p0).all() and np.isfinite(lf0).all()
    print("KERNEL_OK")
</pallas_src>

<mosaic_0001>
module attributes {stable_mosaic.version = 11 : i64} {
  func.func @_conv_kernel(%arg0: i32, %arg1: i32, %arg2: memref<1x288x27xf32, #tpu.memory_space<vmem>>, %arg3: memref<1x27x32xbf16, #tpu.memory_space<vmem>>, %arg4: memref<288x1xf32, #tpu.memory_space<vmem>>, %arg5: memref<1x32xf32, #tpu.memory_space<vmem>>, %arg6: memref<1x332x32xf32, #tpu.memory_space<vmem>>, %arg7: memref<288x32xf32, #tpu.memory_space<vmem>>) attributes {dimension_semantics = [#tpu.dimension_semantics<parallel>, #tpu.dimension_semantics<parallel>], iteration_bounds = array<i64: 1, 2>, scalar_prefetch = 0 : i64, scratch_operands = 1 : i64, tpu.core_type = #tpu.core_type<tc>, window_params = [{transform_indices = @transform_0, window_bounds = array<i64: 1, 288, 27>}, {transform_indices = @transform_1, window_bounds = array<i64: 1, 27, 32>}, {pipeline_mode = #tpu.pipeline_mode<synchronous>, transform_indices = @transform_2, window_bounds = array<i64: 288, 1>}, {transform_indices = @transform_3, window_bounds = array<i64: 1, 32>}, {transform_indices = @transform_4, window_bounds = array<i64: 1, 332, 32>}]} {
    %c0 = arith.constant 0 : index
    %c0_0 = arith.constant 0 : index
    %0 = vector.load %arg5[%c0, %c0_0] : memref<1x32xf32, #tpu.memory_space<vmem>>, vector<1x32xf32>
    %c0_1 = arith.constant 0 : index
    %c0_2 = arith.constant 0 : index
    %1 = vector.load %arg4[%c0_1, %c0_2] : memref<288x1xf32, #tpu.memory_space<vmem>>, vector<288x1xf32>
    %cst = arith.constant 0.000000e+00 : f32
    %2 = vector.broadcast %cst : f32 to vector<20x32xf32>
    %c0_3 = arith.constant 0 : index
    %c0_4 = arith.constant 0 : index
    %c0_5 = arith.constant 0 : index
    %3 = vector.load %arg6[%c0_3, %c0_4, %c0_5] : memref<1x332x32xf32, #tpu.memory_space<vmem>>, vector<1x20x32xf32>
    %4 = vector.shape_cast %3 : vector<1x20x32xf32> to vector<20x32xf32>
    %5 = vector.shape_cast %2 : vector<20x32xf32> to vector<1x20x32xf32>
    tpu.vector_store %arg6[%c0_3, %c0_4, %c0_5], %5 {strides = array<i32>} : memref<1x332x32xf32, #tpu.memory_space<vmem>>, vector<1x20x32xf32>,
    %cst_6 = arith.constant 0.000000e+00 : f32
    %6 = vector.broadcast %cst_6 : f32 to vector<24x32xf32>
    %c0_7 = arith.constant 0 : index
    %c308 = arith.constant 308 : index
    %c0_8 = arith.constant 0 : index
    %7 = vector.load %arg6[%c0_7, %c308, %c0_8] : memref<1x332x32xf32, #tpu.memory_space<vmem>>, vector<1x24x32xf32>
    %8 = vector.shape_cast %7 : vector<1x24x32xf32> to vector<24x32xf32>
    %9 = vector.shape_cast %6 : vector<24x32xf32> to vector<1x24x32xf32>
    tpu.vector_store %arg6[%c0_7, %c308, %c0_8], %9 {strides = array<i32>} : memref<1x332x32xf32, #tpu.memory_space<vmem>>, vector<1x24x32xf32>,
    %c0_9 = arith.constant 0 : index
    %c0_10 = arith.constant 0 : index
    %c0_11 = arith.constant 0 : index
    %10 = vector.load %arg2[%c0_9, %c0_10, %c0_11] : memref<1x288x27xf32, #tpu.memory_space<vmem>>, vector<1x288x27xf32>
    %11 = vector.shape_cast %10 : vector<1x288x27xf32> to vector<288x27xf32>
    %12 = arith.truncf %11 : vector<288x27xf32> to vector<288x27xbf16>
    %c0_12 = arith.constant 0 : index
    %c0_13 = arith.constant 0 : index
    %c0_14 = arith.constant 0 : index
    %13 = vector.load %arg3[%c0_12, %c0_13, %c0_14] : memref<1x27x32xbf16, #tpu.memory_space<vmem>>, vector<1x27x32xbf16>
    %14 = vector.shape_cast %13 : vector<1x27x32xbf16> to vector<27x32xbf16>
    %cst_15 = arith.constant dense<0.000000e+00> : vector<288x32xf32>
    %15 = tpu.matmul %12, %14, %cst_15 {dimension_numbers = #tpu.dot_dimension_numbers<[1], [0], [0], [1], [0, 0, 1, 1], [], []>} : vector<288x27xbf16>, vector<27x32xbf16>, vector<288x32xf32> -> vector<288x32xf32>
    %c0_16 = arith.constant 0 : index
    %c0_17 = arith.constant 0 : index
    %16 = vector.load %arg7[%c0_16, %c0_17] : memref<288x32xf32, #tpu.memory_space<vmem>>, vector<288x32xf32>
    tpu.vector_store %arg7[%c0_16, %c0_17], %15 {strides = array<i32>} : memref<288x32xf32, #tpu.memory_space<vmem>>, vector<288x32xf32>,
    %c0_18 = arith.constant 0 : index
    %c0_19 = arith.constant 0 : index
    %17 = vector.load %arg7[%c0_18, %c0_19] : memref<288x32xf32, #tpu.memory_space<vmem>>, vector<288x32xf32>
    %18 = vector.broadcast %0 : vector<1x32xf32> to vector<288x32xf32>
    %19 = arith.addf %17, %18 : vector<288x32xf32>
    %cst_20 = arith.constant 0.000000e+00 : f32
    %20 = vector.broadcast %cst_20 : f32 to vector<288x32xf32>
    %21 = arith.maximumf %19, %20 : vector<288x32xf32>
    %22 = vector.broadcast %1 : vector<288x1xf32> to vector<288x32xf32>
    %23 = arith.mulf %21, %22 : vector<288x32xf32>
    %c0_21 = arith.constant 0 : index
    %c20 = arith.constant 20 : index
    %c0_22 = arith.constant 0 : index
    %24 = vector.load %arg6[%c0_21, %c20, %c0_22] : memref<1x332x32xf32, #tpu.memory_space<vmem>>, vector<1x288x32xf32>
    %25 = vector.shape_cast %24 : vector<1x288x32xf32> to vector<288x32xf32>
    %26 = vector.shape_cast %23 : vector<288x32xf32> to vector<1x288x32xf32>
    tpu.vector_store %arg6[%c0_21, %c20, %c0_22], %26 {strides = array<i32>} : memref<1x332x32xf32, #tpu.memory_space<vmem>>, vector<1x288x32xf32>,
    return
  }
  func.func @transform_0(%arg0: i32, %arg1: i32) -> (i32, i32, i32) {
    %c0_i32 = arith.constant 0 : i32
    %c0_i32_0 = arith.constant 0 : i32
    %c0_i32_1 = arith.constant 0 : i32
    return %arg1, %c0_i32, %c0_i32_0 : i32, i32, i32
  }
  func.func @transform_1(%arg0: i32, %arg1: i32) -> (i32, i32, i32) {
    %c0_i32 = arith.constant 0 : i32
    %c0_i32_0 = arith.constant 0 : i32
    %c0_i32_1 = arith.constant 0 : i32
    return %c0_i32, %c0_i32_0, %arg0 : i32, i32, i32
  }
  func.func @transform_2(%arg0: i32, %arg1: i32) -> (i32, i32) {
    %c0_i32 = arith.constant 0 : i32
    %c0_i32_0 = arith.constant 0 : i32
    %c0_i32_1 = arith.constant 0 : i32
    return %c0_i32, %c0_i32_0 : i32, i32
  }
  func.func @transform_3(%arg0: i32, %arg1: i32) -> (i32, i32) {
    %c0_i32 = arith.constant 0 : i32
    %c0_i32_0 = arith.constant 0 : i32
    return %c0_i32, %arg0 : i32, i32
  }
  func.func @transform_4(%arg0: i32, %arg1: i32) -> (i32, i32, i32) {
    %c0_i32 = arith.constant 0 : i32
    %c0_i32_0 = arith.constant 0 : i32
    return %arg1, %c0_i32, %arg0 : i32, i32, i32
  }
}

</mosaic_0001>

<llo_original>
// kernel: tpu_custom_call.1
$region0: #{tpu_custom_call.1}
  #allocation0 [shape = 'u32[]', space=smem, size = 0x4, offset = 0x4, fixed_abs, tag = 'smem constant byte address 0x4 - core index']
  #allocation1 [shape = 'u32[144,128]{1,0:T(1,128)}', space=vmem, size = 0x12000, scoped, tag = 'internal scratch']
  #allocation2 [shape = 'f32[288,32]{1,0:T(8,128)}', space=vmem, size = 0x24000, scoped, tag = 'scratch operand']
  %s0 = inlined_call_operand.vmem [shape: f32[2,288,27], index: 0, kind: input, shape index: {}]
  %s1 = inlined_call_operand.vmem [shape: bf16[1,27,32], index: 1, kind: input, shape index: {}]
  %s2 = inlined_call_operand.vmem [shape: f32[288,1], index: 2, kind: input, shape index: {}]
  %s3 = inlined_call_operand.vmem [shape: f32[1,32], index: 3, kind: input, shape index: {}]
  %s4 = inlined_call_operand.vmem [shape: f32[2,332,32], index: 4, kind: output, shape index: {}]
  %s5 = sld [smem:[#allocation0]]
  $region49: #{tpu_custom_call.1} parent=0
    _
  %s7 = ssub.s32 1, %s5
  %s8 = scalar_select 0, %s7, %s5
  loop: start=0, step=1, limit=4
  $region2: #{tpu_custom_call.1} parent=0 // loop_pre_header
    _
  $region3: #{tpu_custom_call.1} parent=0 // loop_header
    %s10 = sphi 0, %s14
    %p11 = scmp.ge.s32.totalorder %s10, 4
    %s17 = sphi 0, %s29
    %s18 = sphi 0, %s25
    %s19 = sphi 0, %s17
    %s20 = sphi 0, %s18
    %s21 = sphi 0, %s19
    %s22 = sphi 0, %s20
    %s32 = sphi 0, %s34
    %s35 = sphi 0, %s32
    %s36 = sphi 0, %s35
    %s52 = sphi 0, %s36
    %s58 = sphi 0, %s60
    %s61 = sphi 0, %s58
    %s62 = sphi 0, %s61
    %s78 = sphi 0, %s62
    %s82 = sphi 0, %s82
    %s84 = sphi 0, %s82
    %s85 = sphi 0, %s84
    %s99 = sphi 0, %s85
    %s105 = sphi 0, %s107
    %s108 = sphi 0, %s105
    %s109 = sphi 0, %s108
    %s125 = sphi 0, %s109
    %s133 = sphi 0, %s135
    %s136 = sphi 0, %s133
    %s137 = sphi 0, %s136
    %s153 = sphi 0, %s137
  $region4: #{tpu_custom_call.1} parent=0 // loop_header_branch
    %13 = sbr.rel (%p11) target = $region8
  $region5: #{tpu_custom_call.1} parent=0 // loop_body
    %s15 = ssub.s32 %s10, 1
    %s16 = ssub.s32 %s10, 2
    %s23 = sadd.s32 1, %s18
    %p24 = scmp.ge.s32.totalorder %s23, 2
    %s25 = scalar_select %p24, 0, %s23
    %s26 = sadd.s32 1, %s17
    %s27 = scalar_select %p24, %s26, %s17
    %p28 = scmp.ge.s32.totalorder %s27, 1
    %s29 = scalar_select %p28, 0, %s27
    %s30 = ssub.s32 %s18, %s25
    %p31 = scmp.eq.s32.totalorder %s30, 0
    %s33 = sadd.s32 %s32, 1
    %s34 = scalar_select %p31, %s32, %s33
    %p37 = pneg %p31
    %p38 = scmp.eq.s32.totalorder %s10, 1
    %p39 = por %p37, %p38
    %p40 = scmp.ne.s32.totalorder %s32, %s35
    %p41 = scmp.eq.s32.totalorder %s10, 0
    %p42 = por %p40, %p41
    %p43 = scmp.ne.s32.totalorder %s32, %s35
    %p44 = scmp.eq.s32.totalorder %s15, 1
    %p45 = por %p43, %p44
    %p46 = scmp.ne.s32.totalorder %s35, %s36
    %p47 = scmp.eq.s32.totalorder %s15, 0
    %p48 = por %p46, %p47
    %p49 = scmp.ne.s32.totalorder %s35, %s36
    %p50 = scmp.eq.s32.totalorder %s16, 1
    %p51 = por %p49, %p50
    %p53 = scmp.ne.s32.totalorder %s36, %s52
    %p54 = scmp.eq.s32.totalorder %s16, 0
    %p55 = por %p53, %p54
    %s56 = ssub.s32 %s17, %s29
    %p57 = scmp.eq.s32.totalorder %s56, 0
    %s59 = sadd.s32 %s58, 1
    %s60 = scalar_select %p57, %s58, %s59
    %p63 = pneg %p57
    %p64 = scmp.eq.s32.totalorder %s10, 1
    %p65 = por %p63, %p64
    %p66 = scmp.ne.s32.totalorder %s58, %s61
    %p67 = scmp.eq.s32.totalorder %s10, 0
    %p68 = por %p66, %p67
    %p69 = scmp.ne.s32.totalorder %s58, %s61
    %p70 = scmp.eq.s32.totalorder %s15, 1
    %p71 = por %p69, %p70
    %p72 = scmp.ne.s32.totalorder %s61, %s62
    %p73 = scmp.eq.s32.totalorder %s15, 0
    %p74 = por %p72, %p73
    %p75 = scmp.ne.s32.totalorder %s61, %s62
    %p76 = scmp.eq.s32.totalorder %s16, 1
    %p77 = por %p75, %p76
    %p79 = scmp.ne.s32.totalorder %s62, %s78
    %p80 = scmp.eq.s32.totalorder %s16, 0
    %p81 = por %p79, %p80
    %s83 = sadd.s32 %s82, 1
    %p86 = scmp.eq.s32.totalorder %s10, 1
    %p87 = scmp.ne.s32.totalorder %s82, %s84
    %p88 = scmp.eq.s32.totalorder %s10, 0
    %p89 = por %p87, %p88
    %p90 = scmp.ne.s32.totalorder %s82, %s84
    %p91 = scmp.eq.s32.totalorder %s15, 1
    %p92 = por %p90, %p91
    %p93 = scmp.ne.s32.totalorder %s84, %s85
    %p94 = scmp.eq.s32.totalorder %s15, 0
    %p95 = por %p93, %p94
    %p96 = scmp.ne.s32.totalorder %s84, %s85
    %p97 = scmp.eq.s32.totalorder %s16, 1
    %p98 = por %p96, %p97
    %p100 = scmp.ne.s32.totalorder %s85, %s99
    %p101 = scmp.eq.s32.totalorder %s16, 0
    %p102 = por %p100, %p101
    %s103 = ssub.s32 %s17, %s29
    %p104 = scmp.eq.s32.totalorder %s103, 0
    %s106 = sadd.s32 %s105, 1
    %s107 = scalar_select %p104, %s105, %s106
    %p110 = pneg %p104
    %p111 = scmp.eq.s32.totalorder %s10, 1
    %p112 = por %p110, %p111
    %p113 = scmp.ne.s32.totalorder %s105, %s108
    %p114 = scmp.eq.s32.totalorder %s10, 0
    %p115 = por %p113, %p114
    %p116 = scmp.ne.s32.totalorder %s105, %s108
    %p117 = scmp.eq.s32.totalorder %s15, 1
    %p118 = por %p116, %p117
    %p119 = scmp.ne.s32.totalorder %s108, %s109
    %p120 = scmp.eq.s32.totalorder %s15, 0
    %p121 = por %p119, %p120
    %p122 = scmp.ne.s32.totalorder %s108, %s109
    %p123 = scmp.eq.s32.totalorder %s16, 1
    %p124 = por %p122, %p123
    %p126 = scmp.ne.s32.totalorder %s109, %s125
    %p127 = scmp.eq.s32.totalorder %s16, 0
    %p128 = por %p126, %p127
    %s129 = ssub.s32 %s18, %s25
    %s130 = ssub.s32 %s17, %s29
    %s131 = sor.u32 %s129, %s130
    %p132 = scmp.eq.s32.totalorder %s131, 0
    %s134 = sadd.s32 %s133, 1
    %s135 = scalar_select %p132, %s133, %s134
    %p138 = pneg %p132
    %p139 = scmp.eq.s32.totalorder %s10, 1
    %p140 = por %p138, %p139
    %p141 = scmp.ne.s32.totalorder %s133, %s136
    %p142 = scmp.eq.s32.totalorder %s10, 0
    %p143 = por %p141, %p142
    %p144 = scmp.ne.s32.totalorder %s133, %s136
    %p145 = scmp.eq.s32.totalorder %s15, 1
    %p146 = por %p144, %p145
    %p147 = scmp.ne.s32.totalorder %s136, %s137
    %p148 = scmp.eq.s32.totalorder %s15, 0
    %p149 = por %p147, %p148
    %p150 = scmp.ne.s32.totalorder %s136, %s137
    %p151 = scmp.eq.s32.totalorder %s16, 1
    %p152 = por %p150, %p151
    %p154 = scmp.ne.s32.totalorder %s137, %s153
    %p155 = scmp.eq.s32.totalorder %s16, 0
    %p156 = por %p154, %p155
    %p157 = scmp.le.s32.totalorder 1, %s10
    %p158 = scmp.lt.s32.totalorder %s10, 3
    %p159 = pnand %p157, %p158
    %p160 = pneg %p159
    // Predicated region
    $region9: #{tpu_custom_call.1} parent=5 // pred_check
      _
    $region10: #{tpu_custom_call.1} parent=5 // pred_check_branch
      %162 = sbr.rel (%p159) target = $region12
    $region11: #{tpu_custom_call.1} parent=5 // pred_region
      %s163 = ssub.s32 %s10, 1
      // Predicated region
      $region13: #{tpu_custom_call.1} parent=11 // pred_check
        %p164 = pneg %p74
      $region14: #{tpu_custom_call.1} parent=11 // pred_check_branch
        %166 = sbr.rel (%p164) target = $region16
      $region15: #{tpu_custom_call.1} parent=11 // pred_region
        %p167 = scmp.lt.s32.totalorder %s19, 0
        %s168 = scalar_select %p167, %s19, 0
        %s169 = smul.addr %s168, 4
        %s170 = scalar_lea.vmem %s1, %s169
      $region16: #{tpu_custom_call.1} parent=11 // pred_fallthru
        _
      // Predicated region
      $region17: #{tpu_custom_call.1} parent=11 // pred_check
        %p171 = pneg %p95
      $region18: #{tpu_custom_call.1} parent=11 // pred_check_branch
        %173 = sbr.rel (%p171) target = $region20
      $region19: #{tpu_custom_call.1} parent=11 // pred_region
        _
      $region20: #{tpu_custom_call.1} parent=11 // pred_fallthru
        _
      // Predicated region
      $region21: #{tpu_custom_call.1} parent=11 // pred_check
        %p174 = pneg %p121
      $region22: #{tpu_custom_call.1} parent=11 // pred_check_branch
        %176 = sbr.rel (%p174) target = $region24
      $region23: #{tpu_custom_call.1} parent=11 // pred_region
        %p177 = scmp.lt.s32.totalorder %s19, 0
        %s178 = scalar_select %p177, %s19, 0
        %s179 = scalar_lea.vmem %s3, %s178
      $region24: #{tpu_custom_call.1} parent=11 // pred_fallthru
        _
    $region12: #{tpu_custom_call.1} parent=5 // pred_fallthru
      _
    %p180 = scmp.lt.s32.totalorder %s10, 2
    // Predicated region
    $region25: #{tpu_custom_call.1} parent=5 // pred_check
      %p181 = pneg %p180
    $region26: #{tpu_custom_call.1} parent=5 // pred_check_branch
      %183 = sbr.rel (%p181) target = $region28
    $region27: #{tpu_custom_call.1} parent=5 // pred_region
      // Predicated region
      $region29: #{tpu_custom_call.1} parent=27 // pred_check
        %p184 = pneg %p42
      $region30: #{tpu_custom_call.1} parent=27 // pred_check_branch
        %186 = sbr.rel (%p184) target = $region32
      $region31: #{tpu_custom_call.1} parent=27 // pred_region
        %p187 = scmp.lt.s32.totalorder %s18, 1
        %s188 = scalar_select %p187, %s18, 1
        %s189 = smul.addr %s188, 36
        %s190 = smul.addr %s189, 8
        %s191 = scalar_lea.vmem %s0, %s190
      $region32: #{tpu_custom_call.1} parent=27 // pred_fallthru
        _
    $region28: #{tpu_custom_call.1} parent=5 // pred_fallthru
      _
    %p192 = scmp.le.s32.totalorder 1, %s10
    %p193 = scmp.lt.s32.totalorder %s10, 3
    %p194 = pnand %p192, %p193
    %p195 = pneg %p194
    // Predicated region
    $region33: #{tpu_custom_call.1} parent=5 // pred_check
      _
    $region34: #{tpu_custom_call.1} parent=5 // pred_check_branch
      %197 = sbr.rel (%p194) target = $region36
    $region35: #{tpu_custom_call.1} parent=5 // pred_region
      %s198 = ssub.s32 %s10, 1
      %p199 = scmp.lt.s32.totalorder %s20, 1
      %s200 = scalar_select %p199, %s20, 1
      %s201 = smul.addr %s200, 36
      %s202 = smul.addr %s201, 8
      %s203 = scalar_lea.vmem %s0, %s202
      %p204 = pneg %p48
      %p205 = pneg %p45
      %p206 = scmp.lt.s32.totalorder %s19, 0
      %s207 = scalar_select %p206, %s19, 0
      %s208 = smul.addr %s207, 4
      %s209 = scalar_lea.vmem %s1, %s208
      %p210 = pneg %p74
      %p211 = pneg %p71
      %p212 = pneg %p95
      %p213 = pneg %p92
      %p214 = scmp.lt.s32.totalorder %s19, 0
      %s215 = scalar_select %p214, %s19, 0
      %s216 = scalar_lea.vmem %s3, %s215
      %p217 = pneg %p121
      %p218 = pneg %p118
      %p219 = pneg %p149
      %p220 = pneg %p146
      %p221 = scmp.lt.s32.totalorder %s20, 1
      %s222 = scalar_select %p221, %s20, 1
      %p223 = scmp.lt.s32.totalorder %s19, 0
      %s224 = scalar_select %p223, %s19, 0
      %s225 = smul.addr %s222, 42
      %s226 = sadd.s32 %s224, %s225
      %s227 = smul.addr %s226, 8
      %s228 = scalar_lea.vmem %s4, %s227
      %p229 = scmp.lt.s32.totalorder %s20, 1
      %s230 = scalar_select %p229, %s20, 1
      %s231 = smul.addr %s230, 36
      %s232 = smul.addr %s231, 8
      %s233 = scalar_lea.vmem %s0, %s232
      %p234 = scmp.lt.s32.totalorder %s19, 0
      %s235 = scalar_select %p234, %s19, 0
      %s236 = smul.addr %s235, 4
      %s237 = scalar_lea.vmem %s1, %s236
      %p238 = scmp.lt.s32.totalorder %s19, 0
      %s239 = scalar_select %p238, %s19, 0
      %s240 = scalar_lea.vmem %s3, %s239
      %p241 = scmp.lt.s32.totalorder %s20, 1
      %s242 = scalar_select %p241, %s20, 1
      %p243 = scmp.lt.s32.totalorder %s19, 0
      %s244 = scalar_select %p243, %s19, 0
      %s245 = smul.addr %s242, 42
      %s246 = sadd.s32 %s244, %s245
      %s247 = smul.addr %s246, 8
      %s248 = scalar_lea.vmem %s4, %s247
      %v250 = vld [vmem:[%s240] sm:$0x1]
      %v251 = vld [vmem:[%s2] sm:$0xff]
      %v252 = vld [vmem:[%s2 + $0x8] sm:$0xff]
      %v253 = vld [vmem:[%s2 + $0x10] sm:$0xff]
      %v254 = vld [vmem:[%s2 + $0x18] sm:$0xff]
      %v255 = vld [vmem:[%s2 + $0x20] sm:$0xff]
      %v256 = vld [vmem:[%s2 + $0x28] sm:$0xff]
      %v257 = vld [vmem:[%s2 + $0x30] sm:$0xff]
      %v258 = vld [vmem:[%s2 + $0x38] sm:$0xff]
      %v259 = vld [vmem:[%s2 + $0x40] sm:$0xff]
      %v260 = vld [vmem:[%s2 + $0x48] sm:$0xff]
      %v261 = vld [vmem:[%s2 + $0x50] sm:$0xff]
      %v262 = vld [vmem:[%s2 + $0x58] sm:$0xff]
      %v263 = vld [vmem:[%s2 + $0x60] sm:$0xff]
      %v264 = vld [vmem:[%s2 + $0x68] sm:$0xff]
      %v265 = vld [vmem:[%s2 + $0x70] sm:$0xff]
      %v266 = vld [vmem:[%s2 + $0x78] sm:$0xff]
      %v267 = vld [vmem:[%s2 + $0x80] sm:$0xff]
      %v268 = vld [vmem:[%s2 + $0x88] sm:$0xff]
      %v269 = vld [vmem:[%s2 + $0x90] sm:$0xff]
      %v270 = vld [vmem:[%s2 + $0x98] sm:$0xff]
      %v271 = vld [vmem:[%s2 + $0xa0] sm:$0xff]
      %v272 = vld [vmem:[%s2 + $0xa8] sm:$0xff]
      %v273 = vld [vmem:[%s2 + $0xb0] sm:$0xff]
      %v274 = vld [vmem:[%s2 + $0xb8] sm:$0xff]
      %v275 = vld [vmem:[%s2 + $0xc0] sm:$0xff]
      %v276 = vld [vmem:[%s2 + $0xc8] sm:$0xff]
      %v277 = vld [vmem:[%s2 + $0xd0] sm:$0xff]
      %v278 = vld [vmem:[%s2 + $0xd8] sm:$0xff]
      %v279 = vld [vmem:[%s2 + $0xe0] sm:$0xff]
      %v280 = vld [vmem:[%s2 + $0xe8] sm:$0xff]
      %v281 = vld [vmem:[%s2 + $0xf0] sm:$0xff]
      %v282 = vld [vmem:[%s2 + $0xf8] sm:$0xff]
      %v283 = vld [vmem:[%s2 + $0x100] sm:$0xff]
      %v284 = vld [vmem:[%s2 + $0x108] sm:$0xff]
      %v285 = vld [vmem:[%s2 + $0x110] sm:$0xff]
      %v286 = vld [vmem:[%s2 + $0x118] sm:$0xff]
      %vm287 = vcmask 261120
      %288 = vst.msk [vmem:[%s248] sm:$0xff] %vm287, 0.0
      %289 = vst.msk [vmem:[%s248 + $0x8] sm:$0xff] %vm287, 0.0
      %vm290 = vcmask 257024
      %291 = vst.msk [vmem:[%s248 + $0x10] sm:$0xf] %vm290, 0.0
      %292 = vst.msk [vmem:[%s248 + $0x134] sm:$0xff] %vm287, 0.0
      %293 = vst.msk [vmem:[%s248 + $0x13c] sm:$0xff] %vm287, 0.0
      %294 = vst.msk [vmem:[%s248 + $0x144] sm:$0xff] %vm287, 0.0
      %v295 = vld [vmem:[%s233] sm:$0xff]
      %v296 = vld [vmem:[%s233 + $0x8] sm:$0xff]
      %v297 = vld [vmem:[%s233 + $0x10] sm:$0xff]
      %v298 = vld [vmem:[%s233 + $0x18] sm:$0xff]
      %v299 = vld [vmem:[%s233 + $0x20] sm:$0xff]
      %v300 = vld [vmem:[%s233 + $0x28] sm:$0xff]
      %v301 = vld [vmem:[%s233 + $0x30] sm:$0xff]
      %v302 = vld [vmem:[%s233 + $0x38] sm:$0xff]
      %v303 = vld [vmem:[%s233 + $0x40] sm:$0xff]
      %v304 = vld [vmem:[%s233 + $0x48] sm:$0xff]
      %v305 = vld [vmem:[%s233 + $0x50] sm:$0xff]
      %v306 = vld [vmem:[%s233 + $0x58] sm:$0xff]
      %v307 = vld [vmem:[%s233 + $0x60] sm:$0xff]
      %v308 = vld [vmem:[%s233 + $0x68] sm:$0xff]
      %v309 = vld [vmem:[%s233 + $0x70] sm:$0xff]
      %v310 = vld [vmem:[%s233 + $0x78] sm:$0xff]
      %v311 = vld [vmem:[%s233 + $0x80] sm:$0xff]
      %v312 = vld [vmem:[%s233 + $0x88] sm:$0xff]
      %v313 = vld [vmem:[%s233 + $0x90] sm:$0xff]
      %v314 = vld [vmem:[%s233 + $0x98] sm:$0xff]
      %v315 = vld [vmem:[%s233 + $0xa0] sm:$0xff]
      %v316 = vld [vmem:[%s233 + $0xa8] sm:$0xff]
      %v317 = vld [vmem:[%s233 + $0xb0] sm:$0xff]
      %v318 = vld [vmem:[%s233 + $0xb8] sm:$0xff]
      %v319 = vld [vmem:[%s233 + $0xc0] sm:$0xff]
      %v320 = vld [vmem:[%s233 + $0xc8] sm:$0xff]
      %v321 = vld [vmem:[%s233 + $0xd0] sm:$0xff]
      %v322 = vld [vmem:[%s233 + $0xd8] sm:$0xff]
      %v323 = vld [vmem:[%s233 + $0xe0] sm:$0xff]
      %v324 = vld [vmem:[%s233 + $0xe8] sm:$0xff]
      %v325 = vld [vmem:[%s233 + $0xf0] sm:$0xff]
      %v326 = vld [vmem:[%s233 + $0xf8] sm:$0xff]
      %v327 = vld [vmem:[%s233 + $0x100] sm:$0xff]
      %v328 = vld [vmem:[%s233 + $0x108] sm:$0xff]
      %v329 = vld [vmem:[%s233 + $0x110] sm:$0xff]
      %v330 = vld [vmem:[%s233 + $0x118] sm:$0xff]
      %v331 = vpack.c.bf16 %v296, %v295
      %v332 = vpack.c.bf16 %v298, %v297
      %v333 = vpack.c.bf16 %v300, %v299
      %v334 = vpack.c.bf16 %v302, %v301
      %v335 = vpack.c.bf16 %v304, %v303
      %v336 = vpack.c.bf16 %v306, %v305
      %v337 = vpack.c.bf16 %v308, %v307
      %v338 = vpack.c.bf16 %v310, %v309
      %v339 = vpack.c.bf16 %v312, %v311
      %v340 = vpack.c.bf16 %v314, %v313
      %v341 = vpack.c.bf16 %v316, %v315
      %v342 = vpack.c.bf16 %v318, %v317
      %v343 = vpack.c.bf16 %v320, %v319
      %v344 = vpack.c.bf16 %v322, %v321
      %v345 = vpack.c.bf16 %v324, %v323
      %v346 = vpack.c.bf16 %v326, %v325
      %v347 = vpack.c.bf16 %v328, %v327
      %v348 = vpack.c.bf16 %v330, %v329
      %v349 = vld [vmem:[%s237] sm:$0xf]
      %v350 = vld [vmem:[%s237 + $0x4] sm:$0xf]
      %v351 = vld [vmem:[%s237 + $0x8] sm:$0xf]
      %v352 = vld [vmem:[%s237 + $0xc] sm:$0x3]
      %v357 = vunpack.c.l.b16 %v349
      %v358 = vunpack.c.l.b16 %v350
      %v359 = vunpack.c.l.b16 %v351
      %v360 = vunpack.c.l.b16 %v352
      %v361 = vpack.c.b16 %v358, %v357
      %v362 = vpack.c.b16 %v360, %v359
      %vm364 = vcmask 220160
      %v366 = vsel %vm364, %v331, 0
      %v369 = vsel %vm364, %v332, 0
      %v372 = vsel %vm364, %v333, 0
      %v375 = vsel %vm364, %v334, 0
      %v378 = vsel %vm364, %v335, 0
      %v381 = vsel %vm364, %v336, 0
      %v384 = vsel %vm364, %v337, 0
      %v387 = vsel %vm364, %v338, 0
      %v390 = vsel %vm364, %v339, 0
      %v393 = vsel %vm364, %v340, 0
      %v396 = vsel %vm364, %v341, 0
      %v399 = vsel %vm364, %v342, 0
      %v402 = vsel %vm364, %v343, 0
      %v405 = vsel %vm364, %v344, 0
      %v408 = vsel %vm364, %v345, 0
      %v411 = vsel %vm364, %v346, 0
      %v414 = vsel %vm364, %v347, 0
      %v417 = vsel %vm364, %v348, 0
      %vm419 = vcmask 1044480
      %vm420 = vcmask 1045504
      %v421 = vsel %vm419, 4294967295, 65535
      %v422 = vsel %vm420, %v421, 0
      %v424 = vand.u32 %v362, %v422
      %426 = vmatprep.subr.bf16.mxu0 0
      %427 = vmatpush1.bf16.msra.mxu0 %v361
      %428 = vmatprep.subr.bf16.mxu0 0
      %429 = vmatpush1.bf16.msra.mxu0 %v424
      %430 = vmatprep.subr.bf16.mxu0 0
      %431 = vmatpush1.bf16.msra.mxu0 0
      %432 = vmatprep.subr.bf16.mxu0 0
      %433 = vmatpush1.bf16.msra.mxu0 0
      %434 = vmatprep.subr.bf16.mxu0 0
      %435 = vmatpush1.bf16.msra.mxu0 0
      %436 = vmatprep.subr.bf16.mxu0 0
      %437 = vmatpush1.bf16.msra.mxu0 0
      %438 = vmatprep.subr.bf16.mxu0 0
      %439 = vmatpush1.bf16.msra.mxu0 0
      %440 = vmatprep.subr.bf16.mxu0 0
      %441 = vmatpush1.bf16.msra.mxu0 0
      %442 = vmatprep.subr.bf16.mxu0 0
      %443 = vmatpush1.bf16.msra.mxu0 0
      %444 = vmatprep.subr.bf16.mxu0 0
      %445 = vmatpush1.bf16.msra.mxu0 0
      %446 = vmatprep.subr.bf16.mxu0 0
      %447 = vmatpush1.bf16.msra.mxu0 0
      %448 = vmatprep.subr.bf16.mxu0 0
      %449 = vmatpush1.bf16.msra.mxu0 0
      %450 = vmatprep.subr.bf16.mxu0 0
      %451 = vmatpush1.bf16.msra.mxu0 0
      %452 = vmatprep.subr.bf16.mxu0 0
      %453 = vmatpush1.bf16.msra.mxu0 0
      %454 = vmatprep.subr.bf16.mxu0 0
      %455 = vmatpush1.bf16.msra.mxu0 0
      %456 = vmatprep.subr.bf16.mxu0 0
      %457 = vmatpush1.bf16.msra.mxu0 0
      %458 = vmatprep.mubr.bf16.mxu0 0
      %459 = vmatmul.mubr.bf16.gmra.mrb[0].mxu0 %v366
      %v460 = vpop.f32.mrb[0].mxu0
      %v461 = vadd.f32 0.0, %v460
      %v462 = vpop.f32.mrb[0].mxu0
      %v463 = vpop.f32.mrb[0].mxu0
      %v464 = vadd.f32 0.0, %v463
      %v465 = vpop.f32.mrb[0].mxu0
      %466 = vmatprep.mubr.bf16.mxu0 0
      %467 = vmatmul.mubr.bf16.gmra.mrb[0].mxu0 %v369
      %v468 = vpop.f32.mrb[0].mxu0
      %v469 = vadd.f32 0.0, %v468
      %v470 = vpop.f32.mrb[0].mxu0
      %v471 = vpop.f32.mrb[0].mxu0
      %v472 = vadd.f32 0.0, %v471
      %v473 = vpop.f32.mrb[0].mxu0
      %474 = vmatprep.mubr.bf16.mxu0 0
      %475 = vmatmul.mubr.bf16.gmra.mrb[0].mxu0 %v372
      %v476 = vpop.f32.mrb[0].mxu0
      %v477 = vadd.f32 0.0, %v476
      %v478 = vpop.f32.mrb[0].mxu0
      %v479 = vpop.f32.mrb[0].mxu0
      %v480 = vadd.f32 0.0, %v479
      %v481 = vpop.f32.mrb[0].mxu0
      %482 = vmatprep.mubr.bf16.mxu0 0
      %483 = vmatmul.mubr.bf16.gmra.mrb[0].mxu0 %v375
      %v484 = vpop.f32.mrb[0].mxu0
      %v485 = vadd.f32 0.0, %v484
      %v486 = vpop.f32.mrb[0].mxu0
      %v487 = vpop.f32.mrb[0].mxu0
      %v488 = vadd.f32 0.0, %v487
      %v489 = vpop.f32.mrb[0].mxu0
      %490 = vmatprep.mubr.bf16.mxu0 0
      %491 = vmatmul.mubr.bf16.gmra.mrb[0].mxu0 %v378
      %v492 = vpop.f32.mrb[0].mxu0
      %v493 = vadd.f32 0.0, %v492
      %v494 = vpop.f32.mrb[0].mxu0
      %v495 = vpop.f32.mrb[0].mxu0
      %v496 = vadd.f32 0.0, %v495
      %v497 = vpop.f32.mrb[0].mxu0
      %498 = vmatprep.mubr.bf16.mxu0 0
      %499 = vmatmul.mubr.bf16.gmra.mrb[0].mxu0 %v381
      %v500 = vpop.f32.mrb[0].mxu0
      %v501 = vadd.f32 0.0, %v500
      %v502 = vpop.f32.mrb[0].mxu0
      %v503 = vpop.f32.mrb[0].mxu0
      %v504 = vadd.f32 0.0, %v503
      %v505 = vpop.f32.mrb[0].mxu0
      %506 = vmatprep.mubr.bf16.mxu0 0
      %507 = vmatmul.mubr.bf16.gmra.mrb[0].mxu0 %v384
      %v508 = vpop.f32.mrb[0].mxu0
      %v509 = vadd.f32 0.0, %v508
      %v510 = vpop.f32.mrb[0].mxu0
      %v511 = vpop.f32.mrb[0].mxu0
      %v512 = vadd.f32 0.0, %v511
      %v513 = vpop.f32.mrb[0].mxu0
      %514 = vmatprep.mubr.bf16.mxu0 0
      %515 = vmatmul.mubr.bf16.gmra.mrb[0].mxu0 %v387
      %v516 = vpop.f32.mrb[0].mxu0
      %v517 = vadd.f32 0.0, %v516
      %v518 = vpop.f32.mrb[0].mxu0
      %v519 = vpop.f32.mrb[0].mxu0
      %v520 = vadd.f32 0.0, %v519
      %v521 = vpop.f32.mrb[0].mxu0
      %522 = vmatprep.mubr.bf16.mxu0 0
      %523 = vmatmul.mubr.bf16.gmra.mrb[0].mxu0 %v390
      %v524 = vpop.f32.mrb[0].mxu0
      %v525 = vadd.f32 0.0, %v524
      %v526 = vpop.f32.mrb[0].mxu0
      %v527 = vpop.f32.mrb[0].mxu0
      %v528 = vadd.f32 0.0, %v527
      %v529 = vpop.f32.mrb[0].mxu0
      %530 = vmatprep.mubr.bf16.mxu0 0
      %531 = vmatmul.mubr.bf16.gmra.mrb[0].mxu0 %v393
      %v532 = vpop.f32.mrb[0].mxu0
      %v533 = vadd.f32 0.0, %v532
      %v534 = vpop.f32.mrb[0].mxu0
      %v535 = vpop.f32.mrb[0].mxu0
      %v536 = vadd.f32 0.0, %v535
      %v537 = vpop.f32.mrb[0].mxu0
      %538 = vmatprep.mubr.bf16.mxu0 0
      %539 = vmatmul.mubr.bf16.gmra.mrb[0].mxu0 %v396
      %v540 = vpop.f32.mrb[0].mxu0
      %v541 = vadd.f32 0.0, %v540
      %v542 = vpop.f32.mrb[0].mxu0
      %v543 = vpop.f32.mrb[0].mxu0
      %v544 = vadd.f32 0.0, %v543
      %v545 = vpop.f32.mrb[0].mxu0
      %546 = vmatprep.mubr.bf16.mxu0 0
      %547 = vmatmul.mubr.bf16.gmra.mrb[0].mxu0 %v399
      %v548 = vpop.f32.mrb[0].mxu0
      %v549 = vadd.f32 0.0, %v548
      %v550 = vpop.f32.mrb[0].mxu0
      %v551 = vpop.f32.mrb[0].mxu0
      %v552 = vadd.f32 0.0, %v551
      %v553 = vpop.f32.mrb[0].mxu0
      %554 = vmatprep.mubr.bf16.mxu0 0
      %555 = vmatmul.mubr.bf16.gmra.mrb[0].mxu0 %v402
      %v556 = vpop.f32.mrb[0].mxu0
      %v557 = vadd.f32 0.0, %v556
      %v558 = vpop.f32.mrb[0].mxu0
      %v559 = vpop.f32.mrb[0].mxu0
      %v560 = vadd.f32 0.0, %v559
      %v561 = vpop.f32.mrb[0].mxu0
      %562 = vmatprep.mubr.bf16.mxu0 0
      %563 = vmatmul.mubr.bf16.gmra.mrb[0].mxu0 %v405
      %v564 = vpop.f32.mrb[0].mxu0
      %v565 = vadd.f32 0.0, %v564
      %v566 = vpop.f32.mrb[0].mxu0
      %v567 = vpop.f32.mrb[0].mxu0
      %v568 = vadd.f32 0.0, %v567
      %v569 = vpop.f32.mrb[0].mxu0
      %570 = vmatprep.mubr.bf16.mxu0 0
      %571 = vmatmul.mubr.bf16.gmra.mrb[0].mxu0 %v408
      %v572 = vpop.f32.mrb[0].mxu0
      %v573 = vadd.f32 0.0, %v572
      %v574 = vpop.f32.mrb[0].mxu0
      %v575 = vpop.f32.mrb[0].mxu0
      %v576 = vadd.f32 0.0, %v575
      %v577 = vpop.f32.mrb[0].mxu0
      %578 = vmatprep.mubr.bf16.mxu0 0
      %579 = vmatmul.mubr.bf16.gmra.mrb[0].mxu0 %v411
      %v580 = vpop.f32.mrb[0].mxu0
      %v581 = vadd.f32 0.0, %v580
      %v582 = vpop.f32.mrb[0].mxu0
      %v583 = vpop.f32.mrb[0].mxu0
      %v584 = vadd.f32 0.0, %v583
      %v585 = vpop.f32.mrb[0].mxu0
      %586 = vmatprep.mubr.bf16.mxu0 0
      %587 = vmatmul.mubr.bf16.gmra.mrb[0].mxu0 %v414
      %v588 = vpop.f32.mrb[0].mxu0
      %v589 = vadd.f32 0.0, %v588
      %v590 = vpop.f32.mrb[0].mxu0
      %v591 = vpop.f32.mrb[0].mxu0
      %v592 = vadd.f32 0.0, %v591
      %v593 = vpop.f32.mrb[0].mxu0
      %594 = vmatprep.mubr.bf16.mxu0 0
      %595 = vmatmul.mubr.bf16.gmra.mrb[0].mxu0 %v417
      %v596 = vpop.f32.mrb[0].mxu0
      %v597 = vadd.f32 0.0, %v596
      %v598 = vpop.f32.mrb[0].mxu0
      %v599 = vpop.f32.mrb[0].mxu0
      %v600 = vadd.f32 0.0, %v599
      %v601 = vpop.f32.mrb[0].mxu0
      %602 = vdwg.mxu0
      %603 = vst.msk [vmem:[#allocation2] sm:$0xff] %vm287, %v461
      %604 = vst.msk [vmem:[#allocation2 + $0x8] sm:$0xff] %vm287, %v464
      %605 = vst.msk [vmem:[#allocation2 + $0x10] sm:$0xff] %vm287, %v469
      %606 = vst.msk [vmem:[#allocation2 + $0x18] sm:$0xff] %vm287, %v472
      %607 = vst.msk [vmem:[#allocation2 + $0x20] sm:$0xff] %vm287, %v477
      %608 = vst.msk [vmem:[#allocation2 + $0x28] sm:$0xff] %vm287, %v480
      %609 = vst.msk [vmem:[#allocation2 + $0x30] sm:$0xff] %vm287, %v485
      %610 = vst.msk [vmem:[#allocation2 + $0x38] sm:$0xff] %vm287, %v488
      %611 = vst.msk [vmem:[#allocation2 + $0x40] sm:$0xff] %vm287, %v493
      %612 = vst.msk [vmem:[#allocation2 + $0x48] sm:$0xff] %vm287, %v496
      %613 = vst.msk [vmem:[#allocation2 + $0x50] sm:$0xff] %vm287, %v501
      %614 = vst.msk [vmem:[#allocation2 + $0x58] sm:$0xff] %vm287, %v504
      %615 = vst.msk [vmem:[#allocation2 + $0x60] sm:$0xff] %vm287, %v509
      %616 = vst.msk [vmem:[#allocation2 + $0x68] sm:$0xff] %vm287, %v512
      %617 = vst.msk [vmem:[#allocation2 + $0x70] sm:$0xff] %vm287, %v517
      %618 = vst.msk [vmem:[#allocation2 + $0x78] sm:$0xff] %vm287, %v520
      %619 = vst.msk [vmem:[#allocation2 + $0x80] sm:$0xff] %vm287, %v525
      %620 = vst.msk [vmem:[#allocation2 + $0x88] sm:$0xff] %vm287, %v528
      %621 = vst.msk [vmem:[#allocation2 + $0x90] sm:$0xff] %vm287, %v533
      %622 = vst.msk [vmem:[#allocation2 + $0x98] sm:$0xff] %vm287, %v536
      %623 = vst.msk [vmem:[#allocation2 + $0xa0] sm:$0xff] %vm287, %v541
      %624 = vst.msk [vmem:[#allocation2 + $0xa8] sm:$0xff] %vm287, %v544
      %625 = vst.msk [vmem:[#allocation2 + $0xb0] sm:$0xff] %vm287, %v549
      %626 = vst.msk [vmem:[#allocation2 + $0xb8] sm:$0xff] %vm287, %v552
      %627 = vst.msk [vmem:[#allocation2 + $0xc0] sm:$0xff] %vm287, %v557
      %628 = vst.msk [vmem:[#allocation2 + $0xc8] sm:$0xff] %vm287, %v560
      %629 = vst.msk [vmem:[#allocation2 + $0xd0] sm:$0xff] %vm287, %v565
      %630 = vst.msk [vmem:[#allocation2 + $0xd8] sm:$0xff] %vm287, %v568
      %631 = vst.msk [vmem:[#allocation2 + $0xe0] sm:$0xff] %vm287, %v573
      %632 = vst.msk [vmem:[#allocation2 + $0xe8] sm:$0xff] %vm287, %v576
      %633 = vst.msk [vmem:[#allocation2 + $0xf0] sm:$0xff] %vm287, %v581
      %634 = vst.msk [vmem:[#allocation2 + $0xf8] sm:$0xff] %vm287, %v584
      %635 = vst.msk [vmem:[#allocation2 + $0x100] sm:$0xff] %vm287, %v589
      %636 = vst.msk [vmem:[#allocation2 + $0x108] sm:$0xff] %vm287, %v592
      %637 = vst.msk [vmem:[#allocation2 + $0x110] sm:$0xff] %vm287, %v597
      %638 = vst.msk [vmem:[#allocation2 + $0x118] sm:$0xff] %vm287, %v600
      %v639 = vld [vmem:[#allocation2] sm:$0xff]
      %v640 = vld [vmem:[#allocation2 + $0x8] sm:$0xff]
      %v641 = vld [vmem:[#allocation2 + $0x10] sm:$0xff]
      %v642 = vld [vmem:[#allocation2 + $0x18] sm:$0xff]
      %v643 = vld [vmem:[#allocation2 + $0x20] sm:$0xff]
      %v644 = vld [vmem:[#allocation2 + $0x28] sm:$0xff]
      %v645 = vld [vmem:[#allocation2 + $0x30] sm:$0xff]
      %v646 = vld [vmem:[#allocation2 + $0x38] sm:$0xff]
      %v647 = vld [vmem:[#allocation2 + $0x40] sm:$0xff]
      %v648 = vld [vmem:[#allocation2 + $0x48] sm:$0xff]
      %v649 = vld [vmem:[#allocation2 + $0x50] sm:$0xff]
      %v650 = vld [vmem:[#allocation2 + $0x58] sm:$0xff]
      %v651 = vld [vmem:[#allocation2 + $0x60] sm:$0xff]
      %v652 = vld [vmem:[#allocation2 + $0x68] sm:$0xff]
      %v653 = vld [vmem:[#allocation2 + $0x70] sm:$0xff]
      %v654 = vld [vmem:[#allocation2 + $0x78] sm:$0xff]
      %v655 = vld [vmem:[#allocation2 + $0x80] sm:$0xff]
      %v656 = vld [vmem:[#allocation2 + $0x88] sm:$0xff]
      %v657 = vld [vmem:[#allocation2 + $0x90] sm:$0xff]
      %v658 = vld [vmem:[#allocation2 + $0x98] sm:$0xff]
      %v659 = vld [vmem:[#allocation2 + $0xa0] sm:$0xff]
      %v660 = vld [vmem:[#allocation2 + $0xa8] sm:$0xff]
      %v661 = vld [vmem:[#allocation2 + $0xb0] sm:$0xff]
      %v662 = vld [vmem:[#allocation2 + $0xb8] sm:$0xff]
      %v663 = vld [vmem:[#allocation2 + $0xc0] sm:$0xff]
      %v664 = vld [vmem:[#allocation2 + $0xc8] sm:$0xff]
      %v665 = vld [vmem:[#allocation2 + $0xd0] sm:$0xff]
      %v666 = vld [vmem:[#allocation2 + $0xd8] sm:$0xff]
      %v667 = vld [vmem:[#allocation2 + $0xe0] sm:$0xff]
      %v668 = vld [vmem:[#allocation2 + $0xe8] sm:$0xff]
      %v669 = vld [vmem:[#allocation2 + $0xf0] sm:$0xff]
      %v670 = vld [vmem:[#allocation2 + $0xf8] sm:$0xff]
      %v671 = vld [vmem:[#allocation2 + $0x100] sm:$0xff]
      %v672 = vld [vmem:[#allocation2 + $0x108] sm:$0xff]
      %v673 = vld [vmem:[#allocation2 + $0x110] sm:$0xff]
      %v674 = vld [vmem:[#allocation2 + $0x118] sm:$0xff]
      %v676 = vlaneseq
      %v677 = vshrl.u32 %v676, 7
      %v678 = vsub.s32 0, %v677
      %v679 = vrot.slane %v250, %v678
      %v681 = vadd.f32 %v639, %v679
      %v682 = vadd.f32 %v640, %v679
      %v683 = vadd.f32 %v641, %v679
      %v684 = vadd.f32 %v642, %v679
      %v685 = vadd.f32 %v643, %v679
      %v686 = vadd.f32 %v644, %v679
      %v687 = vadd.f32 %v645, %v679
      %v688 = vadd.f32 %v646, %v679
      %v689 = vadd.f32 %v647, %v679
      %v690 = vadd.f32 %v648, %v679
      %v691 = vadd.f32 %v649, %v679
      %v692 = vadd.f32 %v650, %v679
      %v693 = vadd.f32 %v651, %v679
      %v694 = vadd.f32 %v652, %v679
      %v695 = vadd.f32 %v653, %v679
      %v696 = vadd.f32 %v654, %v679
      %v697 = vadd.f32 %v655, %v679
      %v698 = vadd.f32 %v656, %v679
      %v699 = vadd.f32 %v657, %v679
      %v700 = vadd.f32 %v658, %v679
      %v701 = vadd.f32 %v659, %v679
      %v702 = vadd.f32 %v660, %v679
      %v703 = vadd.f32 %v661, %v679
      %v704 = vadd.f32 %v662, %v679
      %v705 = vadd.f32 %v663, %v679
      %v706 = vadd.f32 %v664, %v679
      %v707 = vadd.f32 %v665, %v679
      %v708 = vadd.f32 %v666, %v679
      %v709 = vadd.f32 %v667, %v679
      %v710 = vadd.f32 %v668, %v679
      %v711 = vadd.f32 %v669, %v679
      %v712 = vadd.f32 %v670, %v679
      %v713 = vadd.f32 %v671, %v679
      %v714 = vadd.f32 %v672, %v679
      %v715 = vadd.f32 %v673, %v679
      %v716 = vadd.f32 %v674, %v679
      %v717 = vmax.f32 %v681, 0.0
      %v718 = vmax.f32 %v682, 0.0
      %v719 = vmax.f32 %v683, 0.0
      %v720 = vmax.f32 %v684, 0.0
      %v721 = vmax.f32 %v685, 0.0
      %v722 = vmax.f32 %v686, 0.0
      %v723 = vmax.f32 %v687, 0.0
      %v724 = vmax.f32 %v688, 0.0
      %v725 = vmax.f32 %v689, 0.0
      %v726 = vmax.f32 %v690, 0.0
      %v727 = vmax.f32 %v691, 0.0
      %v728 = vmax.f32 %v692, 0.0
      %v729 = vmax.f32 %v693, 0.0
      %v730 = vmax.f32 %v694, 0.0
      %v731 = vmax.f32 %v695, 0.0
      %v732 = vmax.f32 %v696, 0.0
      %v733 = vmax.f32 %v697, 0.0
      %v734 = vmax.f32 %v698, 0.0
      %v735 = vmax.f32 %v699, 0.0
      %v736 = vmax.f32 %v700, 0.0
      %v737 = vmax.f32 %v701, 0.0
      %v738 = vmax.f32 %v702, 0.0
      %v739 = vmax.f32 %v703, 0.0
      %v740 = vmax.f32 %v704, 0.0
      %v741 = vmax.f32 %v705, 0.0
      %v742 = vmax.f32 %v706, 0.0
      %v743 = vmax.f32 %v707, 0.0
      %v744 = vmax.f32 %v708, 0.0
      %v745 = vmax.f32 %v709, 0.0
      %v746 = vmax.f32 %v710, 0.0
      %v747 = vmax.f32 %v711, 0.0
      %v748 = vmax.f32 %v712, 0.0
      %v749 = vmax.f32 %v713, 0.0
      %v750 = vmax.f32 %v714, 0.0
      %v751 = vmax.f32 %v715, 0.0
      %v752 = vmax.f32 %v716, 0.0
      %754 = vset.pattern.permute.xlu0 0
      %755 = vperm.xlu0 %754, %v251
      %v756 = vpop.permute.xlu0 %755
      %759 = vset.pattern.permute.xlu0 0
      %760 = vperm.xlu0 %759, %v252
      %v761 = vpop.permute.xlu0 %760
      %764 = vset.pattern.permute.xlu0 0
      %765 = vperm.xlu0 %764, %v253
      %v766 = vpop.permute.xlu0 %765
      %769 = vset.pattern.permute.xlu0 0
      %770 = vperm.xlu0 %769, %v254
      %v771 = vpop.permute.xlu0 %770
      %774 = vset.pattern.permute.xlu0 0
      %775 = vperm.xlu0 %774, %v255
      %v776 = vpop.permute.xlu0 %775
      %779 = vset.pattern.permute.xlu0 0
      %780 = vperm.xlu0 %779, %v256
      %v781 = vpop.permute.xlu0 %780
      %784 = vset.pattern.permute.xlu0 0
      %785 = vperm.xlu0 %784, %v257
      %v786 = vpop.permute.xlu0 %785
      %789 = vset.pattern.permute.xlu0 0
      %790 = vperm.xlu0 %789, %v258
      %v791 = vpop.permute.xlu0 %790
      %794 = vset.pattern.permute.xlu0 0
      %795 = vperm.xlu0 %794, %v259
      %v796 = vpop.permute.xlu0 %795
      %799 = vset.pattern.permute.xlu0 0
      %800 = vperm.xlu0 %799, %v260
      %v801 = vpop.permute.xlu0 %800
      %804 = vset.pattern.permute.xlu0 0
      %805 = vperm.xlu0 %804, %v261
      %v806 = vpop.permute.xlu0 %805
      %809 = vset.pattern.permute.xlu0 0
      %810 = vperm.xlu0 %809, %v262
      %v811 = vpop.permute.xlu0 %810
      %814 = vset.pattern.permute.xlu0 0
      %815 = vperm.xlu0 %814, %v263
      %v816 = vpop.permute.xlu0 %815
      %819 = vset.pattern.permute.xlu0 0
      %820 = vperm.xlu0 %819, %v264
      %v821 = vpop.permute.xlu0 %820
      %824 = vset.pattern.permute.xlu0 0
      %825 = vperm.xlu0 %824, %v265
      %v826 = vpop.permute.xlu0 %825
      %829 = vset.pattern.permute.xlu0 0
      %830 = vperm.xlu0 %829, %v266
      %v831 = vpop.permute.xlu0 %830
      %834 = vset.pattern.permute.xlu0 0
      %835 = vperm.xlu0 %834, %v267
      %v836 = vpop.permute.xlu0 %835
      %839 = vset.pattern.permute.xlu0 0
      %840 = vperm.xlu0 %839, %v268
      %v841 = vpop.permute.xlu0 %840
      %844 = vset.pattern.permute.xlu0 0
      %845 = vperm.xlu0 %844, %v269
      %v846 = vpop.permute.xlu0 %845
      %849 = vset.pattern.permute.xlu0 0
      %850 = vperm.xlu0 %849, %v270
      %v851 = vpop.permute.xlu0 %850
      %854 = vset.pattern.permute.xlu0 0
      %855 = vperm.xlu0 %854, %v271
      %v856 = vpop.permute.xlu0 %855
      %859 = vset.pattern.permute.xlu0 0
      %860 = vperm.xlu0 %859, %v272
      %v861 = vpop.permute.xlu0 %860
      %864 = vset.pattern.permute.xlu0 0
      %865 = vperm.xlu0 %864, %v273
      %v866 = vpop.permute.xlu0 %865
      %869 = vset.pattern.permute.xlu0 0
      %870 = vperm.xlu0 %869, %v274
      %v871 = vpop.permute.xlu0 %870
      %874 = vset.pattern.permute.xlu0 0
      %875 = vperm.xlu0 %874, %v275
      %v876 = vpop.permute.xlu0 %875
      %879 = vset.pattern.permute.xlu0 0
      %880 = vperm.xlu0 %879, %v276
      %v881 = vpop.permute.xlu0 %880
      %884 = vset.pattern.permute.xlu0 0
      %885 = vperm.xlu0 %884, %v277
      %v886 = vpop.permute.xlu0 %885
      %889 = vset.pattern.permute.xlu0 0
      %890 = vperm.xlu0 %889, %v278
      %v891 = vpop.permute.xlu0 %890
      %894 = vset.pattern.permute.xlu0 0
      %895 = vperm.xlu0 %894, %v279
      %v896 = vpop.permute.xlu0 %895
      %899 = vset.pattern.permute.xlu0 0
      %900 = vperm.xlu0 %899, %v280
      %v901 = vpop.permute.xlu0 %900
      %904 = vset.pattern.permute.xlu0 0
      %905 = vperm.xlu0 %904, %v281
      %v906 = vpop.permute.xlu0 %905
      %909 = vset.pattern.permute.xlu0 0
      %910 = vperm.xlu0 %909, %v282
      %v911 = vpop.permute.xlu0 %910
      %914 = vset.pattern.permute.xlu0 0
      %915 = vperm.xlu0 %914, %v283
      %v916 = vpop.permute.xlu0 %915
      %919 = vset.pattern.permute.xlu0 0
      %920 = vperm.xlu0 %919, %v284
      %v921 = vpop.permute.xlu0 %920
      %924 = vset.pattern.permute.xlu0 0
      %925 = vperm.xlu0 %924, %v285
      %v926 = vpop.permute.xlu0 %925
      %929 = vset.pattern.permute.xlu0 0
      %930 = vperm.xlu0 %929, %v286
      %v931 = vpop.permute.xlu0 %930
      %v933 = vmul.f32 %v717, %v756
      %v934 = vmul.f32 %v718, %v761
      %v935 = vmul.f32 %v719, %v766
      %v936 = vmul.f32 %v720, %v771
      %v937 = vmul.f32 %v721, %v776
      %v938 = vmul.f32 %v722, %v781
      %v939 = vmul.f32 %v723, %v786
      %v940 = vmul.f32 %v724, %v791
      %v941 = vmul.f32 %v725, %v796
      %v942 = vmul.f32 %v726, %v801
      %v943 = vmul.f32 %v727, %v806
      %v944 = vmul.f32 %v728, %v811
      %v945 = vmul.f32 %v729, %v816
      %v946 = vmul.f32 %v730, %v821
      %v947 = vmul.f32 %v731, %v826
      %v948 = vmul.f32 %v732, %v831
      %v949 = vmul.f32 %v733, %v836
      %v950 = vmul.f32 %v734, %v841
      %v951 = vmul.f32 %v735, %v846
      %v952 = vmul.f32 %v736, %v851
      %v953 = vmul.f32 %v737, %v856
      %v954 = vmul.f32 %v738, %v861
      %v955 = vmul.f32 %v739, %v866
      %v956 = vmul.f32 %v740, %v871
      %v957 = vmul.f32 %v741, %v876
      %v958 = vmul.f32 %v742, %v881
      %v959 = vmul.f32 %v743, %v886
      %v960 = vmul.f32 %v744, %v891
      %v961 = vmul.f32 %v745, %v896
      %v962 = vmul.f32 %v746, %v901
      %v963 = vmul.f32 %v747, %v906
      %v964 = vmul.f32 %v748, %v911
      %v965 = vmul.f32 %v749, %v916
      %v966 = vmul.f32 %v750, %v921
      %v967 = vmul.f32 %v751, %v926
      %v968 = vmul.f32 %v752, %v931
      %969 = vst.msk [vmem:[%s248 + $0x14] sm:$0xff] %vm287, %v933
      %970 = vst.msk [vmem:[%s248 + $0x1c] sm:$0xff] %vm287, %v934
      %971 = vst.msk [vmem:[%s248 + $0x24] sm:$0xff] %vm287, %v935
      %972 = vst.msk [vmem:[%s248 + $0x2c] sm:$0xff] %vm287, %v936
      %973 = vst.msk [vmem:[%s248 + $0x34] sm:$0xff] %vm287, %v937
      %974 = vst.msk [vmem:[%s248 + $0x3c] sm:$0xff] %vm287, %v938
      %975 = vst.msk [vmem:[%s248 + $0x44] sm:$0xff] %vm287, %v939
      %976 = vst.msk [vmem:[%s248 + $0x4c] sm:$0xff] %vm287, %v940
      %977 = vst.msk [vmem:[%s248 + $0x54] sm:$0xff] %vm287, %v941
      %978 = vst.msk [vmem:[%s248 + $0x5c] sm:$0xff] %vm287, %v942
      %979 = vst.msk [vmem:[%s248 + $0x64] sm:$0xff] %vm287, %v943
      %980 = vst.msk [vmem:[%s248 + $0x6c] sm:$0xff] %vm287, %v944
      %981 = vst.msk [vmem:[%s248 + $0x74] sm:$0xff] %vm287, %v945
      %982 = vst.msk [vmem:[%s248 + $0x7c] sm:$0xff] %vm287, %v946
      %983 = vst.msk [vmem:[%s248 + $0x84] sm:$0xff] %vm287, %v947
      %984 = vst.msk [vmem:[%s248 + $0x8c] sm:$0xff] %vm287, %v948
      %985 = vst.msk [vmem:[%s248 + $0x94] sm:$0xff] %vm287, %v949
      %986 = vst.msk [vmem:[%s248 + $0x9c] sm:$0xff] %vm287, %v950
      %987 = vst.msk [vmem:[%s248 + $0xa4] sm:$0xff] %vm287, %v951
      %988 = vst.msk [vmem:[%s248 + $0xac] sm:$0xff] %vm287, %v952
      %989 = vst.msk [vmem:[%s248 + $0xb4] sm:$0xff] %vm287, %v953
      %990 = vst.msk [vmem:[%s248 + $0xbc] sm:$0xff] %vm287, %v954
      %991 = vst.msk [vmem:[%s248 + $0xc4] sm:$0xff] %vm287, %v955
      %992 = vst.msk [vmem:[%s248 + $0xcc] sm:$0xff] %vm287, %v956
      %993 = vst.msk [vmem:[%s248 + $0xd4] sm:$0xff] %vm287, %v957
      %994 = vst.msk [vmem:[%s248 + $0xdc] sm:$0xff] %vm287, %v958
      %995 = vst.msk [vmem:[%s248 + $0xe4] sm:$0xff] %vm287, %v959
      %996 = vst.msk [vmem:[%s248 + $0xec] sm:$0xff] %vm287, %v960
      %997 = vst.msk [vmem:[%s248 + $0xf4] sm:$0xff] %vm287, %v961
      %998 = vst.msk [vmem:[%s248 + $0xfc] sm:$0xff] %vm287, %v962
      %999 = vst.msk [vmem:[%s248 + $0x104] sm:$0xff] %vm287, %v963
      %1000 = vst.msk [vmem:[%s248 + $0x10c] sm:$0xff] %vm287, %v964
      %1001 = vst.msk [vmem:[%s248 + $0x114] sm:$0xff] %vm287, %v965
      %1002 = vst.msk [vmem:[%s248 + $0x11c] sm:$0xff] %vm287, %v966
      %1003 = vst.msk [vmem:[%s248 + $0x124] sm:$0xff] %vm287, %v967
      %1004 = vst.msk [vmem:[%s248 + $0x12c] sm:$0xff] %vm287, %v968
      %p1005 = scmp.lt.s32.totalorder %s20, 1
      %s1006 = scalar_select %p1005, %s20, 1
      %p1007 = scmp.lt.s32.totalorder %s19, 0
      %s1008 = scalar_select %p1007, %s19, 0
      %s1009 = smul.addr %s1006, 42
      %s1010 = sadd.s32 %s1008, %s1009
      %s1011 = smul.addr %s1010, 8
      %s1012 = scalar_lea.vmem %s4, %s1011
      // Predicated region
      $region37: #{tpu_custom_call.1} parent=35 // pred_check
        %p1013 = pneg %p146
      $region38: #{tpu_custom_call.1} parent=35 // pred_check_branch
        %1015 = sbr.rel (%p1013) target = $region40
      $region39: #{tpu_custom_call.1} parent=35 // pred_region
        _
      $region40: #{tpu_custom_call.1} parent=35 // pred_fallthru
        _
    $region36: #{tpu_custom_call.1} parent=5 // pred_fallthru
      _
    %p1016 = scmp.le.s32.totalorder 2, %s10
    // Predicated region
    $region41: #{tpu_custom_call.1} parent=5 // pred_check
      %p1017 = pneg %p1016
    $region42: #{tpu_custom_call.1} parent=5 // pred_check_branch
      %1019 = sbr.rel (%p1017) target = $region44
    $region43: #{tpu_custom_call.1} parent=5 // pred_region
      %s1020 = ssub.s32 %s10, 2
      // Predicated region
      $region45: #{tpu_custom_call.1} parent=43 // pred_check
        %p1021 = pneg %p152
      $region46: #{tpu_custom_call.1} parent=43 // pred_check_branch
        %1023 = sbr.rel (%p1021) target = $region48
      $region47: #{tpu_custom_call.1} parent=43 // pred_region
        %p1024 = scmp.lt.s32.totalorder %s22, 1
        %s1025 = scalar_select %p1024, %s22, 1
        %p1026 = scmp.lt.s32.totalorder %s21, 0
        %s1027 = scalar_select %p1026, %s21, 0
        %s1028 = smul.addr %s1025, 42
        %s1029 = sadd.s32 %s1027, %s1028
        %s1030 = smul.addr %s1029, 8
        %s1031 = scalar_lea.vmem %s4, %s1030
      $region48: #{tpu_custom_call.1} parent=43 // pred_fallthru
        _
    $region44: #{tpu_custom_call.1} parent=5 // pred_fallthru
      _
  $region6: #{tpu_custom_call.1} parent=0 // loop_footer
    %s14 = sadd.s32 1, %s10
  $region7: #{tpu_custom_call.1} parent=0 // loop_footer_branch
    %9 = sbr.rel target = $region3
  $region8: #{tpu_custom_call.1} parent=0 // loop_exit
    _

</llo_original>
